<compile_context>
chip_gen: v6e
topology: v6e:2x2x1
jax: 0.10.0
libtpu: 0.0.40
codegen_flags: <defaults>
</compile_context>

<pallas_src>
import functools

import jax
import jax.numpy as jnp
from jax.experimental import pallas as pl
from jax.experimental.pallas import tpu as pltpu


def _round_up(x, m):
    return ((x + m - 1) // m) * m


# ----------------------------------------------------------------------------
# Fused Pallas kernel: block-diagonal (trunk|branch) MLP + head contraction.
# ----------------------------------------------------------------------------
def _fused_deeponet_kernel(*refs, n_layers, nw):
    z_ref = refs[0]
    layer_refs = refs[1:1 + 2 * n_layers]
    sel_ref = refs[1 + 2 * n_layers]
    bias_ref = refs[2 + 2 * n_layers]
    out_ref = refs[3 + 2 * n_layers]

    # Fused MLP: one matmul per layer over block-diagonal weights.  bf16 MXU
    # operands, f32 accumulate / bias / ReLU.
    y = z_ref[...]                                      # bf16 (TM, F+C)
    for layer in range(n_layers):
        w = layer_refs[2 * layer][...]                  # bf16
        b = layer_refs[2 * layer + 1][...]              # f32 (1, dim)
        y = jnp.dot(y, w, preferred_element_type=jnp.float32) + b
        if layer < n_layers - 1:
            y = jnp.maximum(y, 0.0).astype(jnp.bfloat16)

    # Asymmetric last-layer activation: ReLU on trunk lanes only, then the
    # per-head elementwise product.  nw is a multiple of 128 in typical
    # configs so the half-slices are lane-tile aligned.
    h = jnp.maximum(y[:, :nw], 0.0)                     # trunk half
    g = y[:, nw:]                                       # branch half (no ReLU)
    p = (h * g).astype(jnp.bfloat16)                    # (TM, NW)

    # Per-head sum over `width` as one MXU matmul against a block-diagonal
    # 0/1 selector (exact in bf16).  Output lane-dense, stored as bf16.
    out = jnp.dot(p, sel_ref[...], preferred_element_type=jnp.float32)
    out = out + bias_ref[...]
    out_ref[...] = out.astype(out_ref.dtype)


# ----------------------------------------------------------------------------
# Parameter construction (deterministic, mirrors nn.Linear shapes / init)
# ----------------------------------------------------------------------------
def _init_linear(key, fan_in, fan_out):
    kw, kb = jax.random.split(key)
    bound = 1.0 / jnp.sqrt(jnp.float32(fan_in))
    w = jax.random.uniform(kw, (fan_in, fan_out), jnp.float32, -bound, bound)
    b = jax.random.uniform(kb, (fan_out,), jnp.float32, -bound, bound)
    return w, b


def init_deeponet_params(key, num_control, num_pred, num_all_features,
                         trunk_depth, trunk_dim, branch_depth, branch_dim, width):
    keys = jax.random.split(key, trunk_depth + branch_depth)
    ki = 0

    # Trunk: Linear+ReLU chain, final layer also followed by ReLU.
    trunk = []
    if trunk_depth == 1:
        trunk.append(_init_linear(keys[ki], num_all_features, num_pred * width)); ki += 1
    else:
        trunk.append(_init_linear(keys[ki], num_all_features, trunk_dim)); ki += 1
        for _ in range(trunk_depth - 2):
            trunk.append(_init_linear(keys[ki], trunk_dim, trunk_dim)); ki += 1
        trunk.append(_init_linear(keys[ki], trunk_dim, num_pred * width)); ki += 1

    # Branch: Linear+ReLU chain, final layer is plain Linear (no ReLU).
    branch = []
    if branch_depth == 1:
        branch.append(_init_linear(keys[ki], num_control, num_pred * width)); ki += 1
    else:
        branch.append(_init_linear(keys[ki], num_control, branch_dim)); ki += 1
        for _ in range(branch_depth - 2):
            branch.append(_init_linear(keys[ki], branch_dim, branch_dim)); ki += 1
        branch.append(_init_linear(keys[ki], branch_dim, num_pred * width)); ki += 1

    bias = jnp.zeros((num_pred,), jnp.float32)
    return {"trunk": trunk, "branch": branch, "bias": bias}


# ----------------------------------------------------------------------------
# Param prep: block-diagonal fusion + bf16 cast + selector, done ONCE.
# ----------------------------------------------------------------------------
def prepare_fused_params(params, *, num_pred, width):
    trunk = params["trunk"]
    branch = params["branch"]
    assert len(trunk) == len(branch), (
        "fused kernel requires trunk_depth == branch_depth")

    nw = num_pred * width
    n_pad = _round_up(num_pred, 128)

    fused_w, fused_b = [], []
    for (wt, bt), (wb, bb) in zip(trunk, branch):
        kt, nt = wt.shape
        kb, nb = wb.shape
        w = jnp.zeros((kt + kb, nt + nb), jnp.float32)
        w = w.at[:kt, :nt].set(wt).at[kt:, nt:].set(wb)
        fused_w.append(w.astype(jnp.bfloat16))
        fused_b.append(jnp.concatenate([bt, bb]).reshape(1, nt + nb))

    # Block-diagonal 0/1 selector: column n sums the width entries of head n.
    sel = jnp.repeat(jnp.eye(num_pred, dtype=jnp.float32), width, axis=0)
    sel = jnp.pad(sel, ((0, 0), (0, n_pad - num_pred))).astype(jnp.bfloat16)
    bias_pad = jnp.pad(params["bias"], (0, n_pad - num_pred)).reshape(1, n_pad)

    return {"w": fused_w, "b": fused_b, "sel": sel, "bias": bias_pad,
            "nw": nw, "n_pad": n_pad}


# ----------------------------------------------------------------------------
# Forward pass: one fused pallas_call; XLA glue only for slice/concat/pad.
# ----------------------------------------------------------------------------
def deeponet_forward(fused, x_past, x_control, *, num_pred, out_len, width,
                     row_tile=2048):
    B, Lp, F = x_past.shape
    Bc, Lc, C = x_control.shape
    assert Bc == B and Lc == out_len and Lp >= out_len

    nw = fused["nw"]
    n_pad = fused["n_pad"]
    fused_w, fused_b = fused["w"], fused["b"]
    n_layers = len(fused_w)

    # Only the last out_len trunk timesteps contribute: slice before the MLP
    # (exact, since the trunk is row-wise).  Single bf16 [xp | xc] input.
    xp = x_past[:, -out_len:, :].reshape(B * out_len, F)
    xc = x_control.reshape(B * out_len, C)
    z = jnp.concatenate([xp, xc], axis=1).astype(jnp.bfloat16)

    # Row tiling: >= 2 sublane-aligned tiles (keeps both v7x TensorCores busy
    # on the "parallel" axis); padded-row waste bounded to < 8 rows per tile.
    M = B * out_len
    n_tiles = max(2, pl.cdiv(M, row_tile))
    TM = _round_up(pl.cdiv(M, n_tiles), 8)
    M_pad = n_tiles * TM
    if M_pad != M:
        z = jnp.pad(z, ((0, M_pad - M), (0, 0)))

    args = [z]
    in_specs = [pl.BlockSpec((TM, F + C), lambda i: (i, 0))]
    for w, b in zip(fused_w, fused_b):
        args += [w, b]
        in_specs += [pl.BlockSpec(w.shape, lambda i: (0, 0)),   # VMEM resident
                     pl.BlockSpec(b.shape, lambda i: (0, 0))]
    args += [fused["sel"], fused["bias"]]
    in_specs += [pl.BlockSpec(fused["sel"].shape, lambda i: (0, 0)),
                 pl.BlockSpec(fused["bias"].shape, lambda i: (0, 0))]

    # Advisory cost estimate for XLA scheduling around the custom call.
    flops_per_row = sum(2 * w.shape[0] * w.shape[1] for w in fused_w)
    flops_per_row += nw + 2 * nw * n_pad
    flops = int(flops_per_row) * int(M_pad)
    bytes_accessed = int(
        z.size * 2
        + sum(w.size * 2 for w in fused_w)
        + sum(b.size * 4 for b in fused_b)
        + fused["sel"].size * 2 + fused["bias"].size * 4
        + M_pad * n_pad * 2)

    out = pl.pallas_call(
        functools.partial(_fused_deeponet_kernel, n_layers=n_layers, nw=nw),
        out_shape=jax.ShapeDtypeStruct((M_pad, n_pad), jnp.bfloat16),
        grid=(n_tiles,),
        in_specs=in_specs,
        out_specs=pl.BlockSpec((TM, n_pad), lambda i: (i, 0)),
        compiler_params=pltpu.CompilerParams(
            dimension_semantics=("parallel",),
            vmem_limit_bytes=32 * 1024 * 1024),
        cost_estimate=pl.CostEstimate(
            flops=flops, transcendentals=0, bytes_accessed=bytes_accessed),
    )(*args)

    return out[:M, :num_pred].astype(jnp.float32).reshape(B, out_len, num_pred)


# Pure-JAX f32 reference (mirrors the PyTorch module exactly, including
# running the trunk over the FULL history before slicing).
def deeponet_reference(params, x_past, x_control, *, num_pred, out_len, width):
    h = x_past
    for (w, b) in params["trunk"]:
        h = jnp.maximum(h @ w + b, 0.0)
    g = x_control
    n_branch = len(params["branch"])
    for i, (w, b) in enumerate(params["branch"]):
        g = g @ w + b
        if i < n_branch - 1:
            g = jnp.maximum(g, 0.0)
    B, Lp, _ = x_past.shape
    h = h.reshape(B, Lp, num_pred, width)[:, -out_len:]
    g = g.reshape(B, out_len, num_pred, width)
    return jnp.sum(h * g, axis=-1) + params["bias"]


# ----------------------------------------------------------------------------
if __name__ == "__main__":
    # Small configuration consistent with the module's forward.
    num_control = 8
    num_pred = 4
    num_all_features = 16
    out_len = 4
    trunk_depth = 3
    trunk_dim = 64
    branch_depth = 3
    branch_dim = 64
    width = 32

    B = 2
    L_past = 8        # trunk sequence length (>= out_len)

    key = jax.random.PRNGKey(0)
    kp, kx, kc = jax.random.split(key, 3)

    params = init_deeponet_params(
        kp, num_control, num_pred, num_all_features,
        trunk_depth, trunk_dim, branch_depth, branch_dim, width)
    fused = prepare_fused_params(params, num_pred=num_pred, width=width)

    x_past = jax.random.normal(kx, (B, L_past, num_all_features), jnp.float32)
    x_control = jax.random.normal(kc, (B, out_len, num_control), jnp.float32)

    y = deeponet_forward(fused, x_past, x_control,
                         num_pred=num_pred, out_len=out_len, width=width)
    y = jax.block_until_ready(y)

    y_ref = deeponet_reference(params, x_past, x_control,
                               num_pred=num_pred, out_len=out_len, width=width)
    assert y.shape == (B, out_len, num_pred)
    # bf16 MXU operands + bf16 output store -> loosened (but tight for bf16)
    # tolerance vs. the f32 reference.
    assert jnp.allclose(y, y_ref, atol=3e-2, rtol=3e-2), (
        float(jnp.max(jnp.abs(y - y_ref))))

    # Second check: larger batch to exercise a >2-step row grid and the
    # row-padding path (row_tile=64 -> 3 tiles of 56 rows for M=160).
    B2 = 40
    x_past2 = jax.random.normal(jax.random.PRNGKey(1),
                                (B2, L_past, num_all_features), jnp.float32)
    x_control2 = jax.random.normal(jax.random.PRNGKey(2),
                                   (B2, out_len, num_control), jnp.float32)
    y2 = deeponet_forward(fused, x_past2, x_control2,
                          num_pred=num_pred, out_len=out_len, width=width,
                          row_tile=64)
    y2 = jax.block_until_ready(y2)
    y2_ref = deeponet_reference(params, x_past2, x_control2,
                                num_pred=num_pred, out_len=out_len, width=width)
    assert jnp.allclose(y2, y2_ref, atol=3e-2, rtol=3e-2), (
        float(jnp.max(jnp.abs(y2 - y2_ref))))

    print("KERNEL_OK")
</pallas_src>

<mosaic_0001>
module attributes {stable_mosaic.version = 11 : i64} {
  func.func @_fused_deeponet_kernel(%arg0: i32, %arg1: memref<8x24xbf16, #tpu.memory_space<vmem>>, %arg2: memref<24x128xbf16, #tpu.memory_space<vmem>>, %arg3: memref<1x128xf32, #tpu.memory_space<vmem>>, %arg4: memref<128x128xbf16, #tpu.memory_space<vmem>>, %arg5: memref<1x128xf32, #tpu.memory_space<vmem>>, %arg6: memref<128x256xbf16, #tpu.memory_space<vmem>>, %arg7: memref<1x256xf32, #tpu.memory_space<vmem>>, %arg8: memref<128x128xbf16, #tpu.memory_space<vmem>>, %arg9: memref<1x128xf32, #tpu.memory_space<vmem>>, %arg10: memref<8x128xbf16, #tpu.memory_space<vmem>>) attributes {dimension_semantics = [#tpu.dimension_semantics<parallel>], iteration_bounds = array<i64: 2>, scalar_prefetch = 0 : i64, scratch_operands = 0 : i64, tpu.core_type = #tpu.core_type<tc>, window_params = [{transform_indices = @transform_0, window_bounds = array<i64: 8, 24>}, {pipeline_mode = #tpu.pipeline_mode<synchronous>, transform_indices = @transform_1, window_bounds = array<i64: 24, 128>}, {pipeline_mode = #tpu.pipeline_mode<synchronous>, transform_indices = @transform_2, window_bounds = array<i64: 1, 128>}, {pipeline_mode = #tpu.pipeline_mode<synchronous>, transform_indices = @transform_3, window_bounds = array<i64: 128, 128>}, {pipeline_mode = #tpu.pipeline_mode<synchronous>, transform_indices = @transform_4, window_bounds = array<i64: 1, 128>}, {pipeline_mode = #tpu.pipeline_mode<synchronous>, transform_indices = @transform_5, window_bounds = array<i64: 128, 256>}, {pipeline_mode = #tpu.pipeline_mode<synchronous>, transform_indices = @transform_6, window_bounds = array<i64: 1, 256>}, {pipeline_mode = #tpu.pipeline_mode<synchronous>, transform_indices = @transform_7, window_bounds = array<i64: 128, 128>}, {pipeline_mode = #tpu.pipeline_mode<synchronous>, transform_indices = @transform_8, window_bounds = array<i64: 1, 128>}, {transform_indices = @transform_9, window_bounds = array<i64: 8, 128>}]} {
    %c0 = arith.constant 0 : index
    %c0_0 = arith.constant 0 : index
    %0 = vector.load %arg1[%c0, %c0_0] : memref<8x24xbf16, #tpu.memory_space<vmem>>, vector<8x24xbf16>
    %c0_1 = arith.constant 0 : index
    %c0_2 = arith.constant 0 : index
    %1 = vector.load %arg2[%c0_1, %c0_2] : memref<24x128xbf16, #tpu.memory_space<vmem>>, vector<24x128xbf16>
    %c0_3 = arith.constant 0 : index
    %c0_4 = arith.constant 0 : index
    %2 = vector.load %arg3[%c0_3, %c0_4] : memref<1x128xf32, #tpu.memory_space<vmem>>, vector<1x128xf32>
    %cst = arith.constant dense<0.000000e+00> : vector<8x128xf32>
    %3 = tpu.matmul %0, %1, %cst {dimension_numbers = #tpu.dot_dimension_numbers<[1], [0], [0], [1], [0, 0, 1, 1], [], []>} : vector<8x24xbf16>, vector<24x128xbf16>, vector<8x128xf32> -> vector<8x128xf32>
    %4 = vector.broadcast %2 : vector<1x128xf32> to vector<8x128xf32>
    %5 = arith.addf %3, %4 : vector<8x128xf32>
    %cst_5 = arith.constant 0.000000e+00 : f32
    %6 = vector.broadcast %cst_5 : f32 to vector<8x128xf32>
    %7 = arith.maximumf %5, %6 : vector<8x128xf32>
    %8 = arith.truncf %7 : vector<8x128xf32> to vector<8x128xbf16>
    %c0_6 = arith.constant 0 : index
    %c0_7 = arith.constant 0 : index
    %9 = vector.load %arg4[%c0_6, %c0_7] : memref<128x128xbf16, #tpu.memory_space<vmem>>, vector<128x128xbf16>
    %c0_8 = arith.constant 0 : index
    %c0_9 = arith.constant 0 : index
    %10 = vector.load %arg5[%c0_8, %c0_9] : memref<1x128xf32, #tpu.memory_space<vmem>>, vector<1x128xf32>
    %cst_10 = arith.constant dense<0.000000e+00> : vector<8x128xf32>
    %11 = tpu.matmul %8, %9, %cst_10 {dimension_numbers = #tpu.dot_dimension_numbers<[1], [0], [0], [1], [0, 0, 1, 1], [], []>} : vector<8x128xbf16>, vector<128x128xbf16>, vector<8x128xf32> -> vector<8x128xf32>
    %12 = vector.broadcast %10 : vector<1x128xf32> to vector<8x128xf32>
    %13 = arith.addf %11, %12 : vector<8x128xf32>
    %cst_11 = arith.constant 0.000000e+00 : f32
    %14 = vector.broadcast %cst_11 : f32 to vector<8x128xf32>
    %15 = arith.maximumf %13, %14 : vector<8x128xf32>
    %16 = arith.truncf %15 : vector<8x128xf32> to vector<8x128xbf16>
    %c0_12 = arith.constant 0 : index
    %c0_13 = arith.constant 0 : index
    %17 = vector.load %arg6[%c0_12, %c0_13] : memref<128x256xbf16, #tpu.memory_space<vmem>>, vector<128x256xbf16>
    %c0_14 = arith.constant 0 : index
    %c0_15 = arith.constant 0 : index
    %18 = vector.load %arg7[%c0_14, %c0_15] : memref<1x256xf32, #tpu.memory_space<vmem>>, vector<1x256xf32>
    %cst_16 = arith.constant dense<0.000000e+00> : vector<8x256xf32>
    %19 = tpu.matmul %16, %17, %cst_16 {dimension_numbers = #tpu.dot_dimension_numbers<[1], [0], [0], [1], [0, 0, 1, 1], [], []>} : vector<8x128xbf16>, vector<128x256xbf16>, vector<8x256xf32> -> vector<8x256xf32>
    %20 = vector.broadcast %18 : vector<1x256xf32> to vector<8x256xf32>
    %21 = arith.addf %19, %20 : vector<8x256xf32>
    %22 = vector.extract_strided_slice %21 {offsets = [0, 0], sizes = [8, 128], strides = [1, 1]} : vector<8x256xf32> to vector<8x128xf32>
    %cst_17 = arith.constant 0.000000e+00 : f32
    %23 = vector.broadcast %cst_17 : f32 to vector<8x128xf32>
    %24 = arith.maximumf %22, %23 : vector<8x128xf32>
    %25 = vector.extract_strided_slice %21 {offsets = [0, 128], sizes = [8, 128], strides = [1, 1]} : vector<8x256xf32> to vector<8x128xf32>
    %26 = arith.mulf %24, %25 : vector<8x128xf32>
    %27 = arith.truncf %26 : vector<8x128xf32> to vector<8x128xbf16>
    %c0_18 = arith.constant 0 : index
    %c0_19 = arith.constant 0 : index
    %28 = vector.load %arg8[%c0_18, %c0_19] : memref<128x128xbf16, #tpu.memory_space<vmem>>, vector<128x128xbf16>
    %cst_20 = arith.constant dense<0.000000e+00> : vector<8x128xf32>
    %29 = tpu.matmul %27, %28, %cst_20 {dimension_numbers = #tpu.dot_dimension_numbers<[1], [0], [0], [1], [0, 0, 1, 1], [], []>} : vector<8x128xbf16>, vector<128x128xbf16>, vector<8x128xf32> -> vector<8x128xf32>
    %c0_21 = arith.constant 0 : index
    %c0_22 = arith.constant 0 : index
    %30 = vector.load %arg9[%c0_21, %c0_22] : memref<1x128xf32, #tpu.memory_space<vmem>>, vector<1x128xf32>
    %31 = vector.broadcast %30 : vector<1x128xf32> to vector<8x128xf32>
    %32 = arith.addf %29, %31 : vector<8x128xf32>
    %33 = arith.truncf %32 : vector<8x128xf32> to vector<8x128xbf16>
    %c0_23 = arith.constant 0 : index
    %c0_24 = arith.constant 0 : index
    %34 = vector.load %arg10[%c0_23, %c0_24] : memref<8x128xbf16, #tpu.memory_space<vmem>>, vector<8x128xbf16>
    tpu.vector_store %arg10[%c0_23, %c0_24], %33 {strides = array<i32>} : memref<8x128xbf16, #tpu.memory_space<vmem>>, vector<8x128xbf16>,
    return
  }
  func.func @transform_0(%arg0: i32) -> (i32, i32) {
    %c0_i32 = arith.constant 0 : i32
    %c0_i32_0 = arith.constant 0 : i32
    return %arg0, %c0_i32 : i32, i32
  }
  func.func @transform_1(%arg0: i32) -> (i32, i32) {
    %c0_i32 = arith.constant 0 : i32
    %c0_i32_0 = arith.constant 0 : i32
    %c0_i32_1 = arith.constant 0 : i32
    return %c0_i32, %c0_i32_0 : i32, i32
  }
  func.func @transform_2(%arg0: i32) -> (i32, i32) {
    %c0_i32 = arith.constant 0 : i32
    %c0_i32_0 = arith.constant 0 : i32
    %c0_i32_1 = arith.constant 0 : i32
    return %c0_i32, %c0_i32_0 : i32, i32
  }
  func.func @transform_3(%arg0: i32) -> (i32, i32) {
    %c0_i32 = arith.constant 0 : i32
    %c0_i32_0 = arith.constant 0 : i32
    %c0_i32_1 = arith.constant 0 : i32
    return %c0_i32, %c0_i32_0 : i32, i32
  }
  func.func @transform_4(%arg0: i32) -> (i32, i32) {
    %c0_i32 = arith.constant 0 : i32
    %c0_i32_0 = arith.constant 0 : i32
    %c0_i32_1 = arith.constant 0 : i32
    return %c0_i32, %c0_i32_0 : i32, i32
  }
  func.func @transform_5(%arg0: i32) -> (i32, i32) {
    %c0_i32 = arith.constant 0 : i32
    %c0_i32_0 = arith.constant 0 : i32
    %c0_i32_1 = arith.constant 0 : i32
    return %c0_i32, %c0_i32_0 : i32, i32
  }
  func.func @transform_6(%arg0: i32) -> (i32, i32) {
    %c0_i32 = arith.constant 0 : i32
    %c0_i32_0 = arith.constant 0 : i32
    %c0_i32_1 = arith.constant 0 : i32
    return %c0_i32, %c0_i32_0 : i32, i32
  }
  func.func @transform_7(%arg0: i32) -> (i32, i32) {
    %c0_i32 = arith.constant 0 : i32
    %c0_i32_0 = arith.constant 0 : i32
    %c0_i32_1 = arith.constant 0 : i32
    return %c0_i32, %c0_i32_0 : i32, i32
  }
  func.func @transform_8(%arg0: i32) -> (i32, i32) {
    %c0_i32 = arith.constant 0 : i32
    %c0_i32_0 = arith.constant 0 : i32
    %c0_i32_1 = arith.constant 0 : i32
    return %c0_i32, %c0_i32_0 : i32, i32
  }
  func.func @transform_9(%arg0: i32) -> (i32, i32) {
    %c0_i32 = arith.constant 0 : i32
    %c0_i32_0 = arith.constant 0 : i32
    return %arg0, %c0_i32 : i32, i32
  }
}

</mosaic_0001>

<llo_original>
// kernel: tpu_custom_call.1
$region0: #{tpu_custom_call.1}
  #allocation0 [shape = 'u32[]', space=smem, size = 0x4, offset = 0x4, fixed_abs, tag = 'smem constant byte address 0x4 - core index']
  #allocation1 [shape = 'u32[144,128]{1,0:T(1,128)}', space=vmem, size = 0x12000, scoped, tag = 'internal scratch']
  %s0 = inlined_call_operand.hbm [shape: bf16[16,24], index: 0, kind: input, shape index: {}]
  %s1 = inlined_call_operand.hbm [shape: bf16[24,128], index: 1, kind: input, shape index: {}]
  %s2 = inlined_call_operand.vmem [shape: f32[1,128], index: 2, kind: input, shape index: {}]
  %s3 = inlined_call_operand.hbm [shape: bf16[128,128], index: 3, kind: input, shape index: {}]
  %s4 = inlined_call_operand.vmem [shape: f32[1,128], index: 4, kind: input, shape index: {}]
  %s5 = inlined_call_operand.hbm [shape: bf16[128,256], index: 5, kind: input, shape index: {}]
  %s6 = inlined_call_operand.vmem [shape: f32[1,256], index: 6, kind: input, shape index: {}]
  %s7 = inlined_call_operand.hbm [shape: bf16[128,128], index: 7, kind: input, shape index: {}]
  %s8 = inlined_call_operand.vmem [shape: f32[1,128], index: 8, kind: input, shape index: {}]
  %s9 = inlined_call_operand.hbm [shape: bf16[16,128], index: 9, kind: output, shape index: {}]
  %s10 = sld [smem:[#allocation0]]
  $region89: #{tpu_custom_call.1} parent=0
    _
  %s12 = ssub.s32 1, %s10
  %s13 = scalar_select 0, %s12, %s10
  $region1: #{tpu_custom_call.1} parent=0
    #allocation2 [shape = 'u8[4096]{0}', space=vmem, size = 0x1000, scoped, tag = 'input window, operand 0']
    #allocation3 [shape = 's32[2]{0}', space=sflag, size = 0x8, scoped, tag = 'scoped memory for tpu_custom_call.1']
    #allocation4 [shape = 's32[2]{0}', space=sflag, size = 0x8, scoped, tag = 'scoped memory for tpu_custom_call.1']
    #allocation5 [shape = 'u8[6144]{0}', space=vmem, size = 0x1800, scoped, tag = 'input window, operand 1, single buffered']
    #allocation6 [shape = 's32[1]{0}', space=sflag, size = 0x4, scoped, tag = 'scoped memory for tpu_custom_call.1']
    #allocation7 [shape = 'u8[32768]{0}', space=vmem, size = 0x8000, scoped, tag = 'input window, operand 3, single buffered']
    #allocation8 [shape = 'u8[65536]{0}', space=vmem, size = 0x10000, scoped, tag = 'input window, operand 5, single buffered']
    #allocation9 [shape = 's32[1]{0}', space=sflag, size = 0x4, scoped, tag = 'scoped memory for tpu_custom_call.1']
    #allocation10 [shape = 'u8[32768]{0}', space=vmem, size = 0x8000, scoped, tag = 'input window, operand 7, single buffered']
    #allocation11 [shape = 'u8[4096]{0}', space=vmem, size = 0x1000, scoped, tag = 'output window, operand 0']
    %14 = vsyncpa [#allocation3], 0
    %s15 = scalar_lea.sflag [#allocation3], 1
    %16 = vsyncpa %s15, 0
    %17 = vsyncpa [#allocation6], 0
    %18 = vsyncpa [#allocation9], 0
    %19 = vsyncpa [#allocation4], 0
    %s20 = scalar_lea.sflag [#allocation4], 1
    %21 = vsyncpa %s20, 0
    loop: start=0, step=1, limit=4
    $region2: #{tpu_custom_call.1} parent=1 // loop_pre_header
      _
    $region3: #{tpu_custom_call.1} parent=1 // loop_header
      %s23 = sphi 0, %s27
      %p24 = scmp.ge.s32.totalorder %s23, 4
      %s33 = sphi 0, %s35
      %s36 = sphi 0, %s33
      %s37 = sphi 0, %s36
      %s53 = sphi 0, %s37
      %s57 = sphi 0, %s57
      %s59 = sphi 0, %s57
      %s60 = sphi 0, %s59
      %s74 = sphi 0, %s60
      %s78 = sphi 0, %s78
      %s80 = sphi 0, %s78
      %s81 = sphi 0, %s80
      %s95 = sphi 0, %s81
      %s99 = sphi 0, %s99
      %s101 = sphi 0, %s99
      %s102 = sphi 0, %s101
      %s116 = sphi 0, %s102
      %s120 = sphi 0, %s120
      %s122 = sphi 0, %s120
      %s123 = sphi 0, %s122
      %s137 = sphi 0, %s123
      %s141 = sphi 0, %s141
      %s143 = sphi 0, %s141
      %s144 = sphi 0, %s143
      %s158 = sphi 0, %s144
      %s162 = sphi 0, %s162
      %s164 = sphi 0, %s162
      %s165 = sphi 0, %s164
      %s179 = sphi 0, %s165
      %s183 = sphi 0, %s183
      %s185 = sphi 0, %s183
      %s186 = sphi 0, %s185
      %s200 = sphi 0, %s186
      %s204 = sphi 0, %s204
      %s206 = sphi 0, %s204
      %s207 = sphi 0, %s206
      %s221 = sphi 0, %s207
      %s227 = sphi 0, %s229
      %s230 = sphi 0, %s227
      %s231 = sphi 0, %s230
      %s247 = sphi 0, %s231
    $region4: #{tpu_custom_call.1} parent=1 // loop_header_branch
      %26 = sbr.rel (%p24) target = $region8
    $region5: #{tpu_custom_call.1} parent=1 // loop_body
      %s28 = ssub.s32 %s23, 1
      %s29 = ssub.s32 %s23, 2
      %s30 = sadd.s32 %s23, 1
      %s31 = ssub.s32 %s23, %s30
      %p32 = scmp.eq.s32.totalorder %s31, 0
      %s34 = sadd.s32 %s33, 1
      %s35 = scalar_select %p32, %s33, %s34
      %p38 = pneg %p32
      %p39 = scmp.eq.s32.totalorder %s23, 1
      %p40 = por %p38, %p39
      %p41 = scmp.ne.s32.totalorder %s33, %s36
      %p42 = scmp.eq.s32.totalorder %s23, 0
      %p43 = por %p41, %p42
      %p44 = scmp.ne.s32.totalorder %s33, %s36
      %p45 = scmp.eq.s32.totalorder %s28, 1
      %p46 = por %p44, %p45
      %p47 = scmp.ne.s32.totalorder %s36, %s37
      %p48 = scmp.eq.s32.totalorder %s28, 0
      %p49 = por %p47, %p48
      %p50 = scmp.ne.s32.totalorder %s36, %s37
      %p51 = scmp.eq.s32.totalorder %s29, 1
      %p52 = por %p50, %p51
      %p54 = scmp.ne.s32.totalorder %s37, %s53
      %p55 = scmp.eq.s32.totalorder %s29, 0
      %p56 = por %p54, %p55
      %s58 = sadd.s32 %s57, 1
      %p61 = scmp.eq.s32.totalorder %s23, 1
      %p62 = scmp.ne.s32.totalorder %s57, %s59
      %p63 = scmp.eq.s32.totalorder %s23, 0
      %p64 = por %p62, %p63
      %p65 = scmp.ne.s32.totalorder %s57, %s59
      %p66 = scmp.eq.s32.totalorder %s28, 1
      %p67 = por %p65, %p66
      %p68 = scmp.ne.s32.totalorder %s59, %s60
      %p69 = scmp.eq.s32.totalorder %s28, 0
      %p70 = por %p68, %p69
      %p71 = scmp.ne.s32.totalorder %s59, %s60
      %p72 = scmp.eq.s32.totalorder %s29, 1
      %p73 = por %p71, %p72
      %p75 = scmp.ne.s32.totalorder %s60, %s74
      %p76 = scmp.eq.s32.totalorder %s29, 0
      %p77 = por %p75, %p76
      %s79 = sadd.s32 %s78, 1
      %p82 = scmp.eq.s32.totalorder %s23, 1
      %p83 = scmp.ne.s32.totalorder %s78, %s80
      %p84 = scmp.eq.s32.totalorder %s23, 0
      %p85 = por %p83, %p84
      %p86 = scmp.ne.s32.totalorder %s78, %s80
      %p87 = scmp.eq.s32.totalorder %s28, 1
      %p88 = por %p86, %p87
      %p89 = scmp.ne.s32.totalorder %s80, %s81
      %p90 = scmp.eq.s32.totalorder %s28, 0
      %p91 = por %p89, %p90
      %p92 = scmp.ne.s32.totalorder %s80, %s81
      %p93 = scmp.eq.s32.totalorder %s29, 1
      %p94 = por %p92, %p93
      %p96 = scmp.ne.s32.totalorder %s81, %s95
      %p97 = scmp.eq.s32.totalorder %s29, 0
      %p98 = por %p96, %p97
      %s100 = sadd.s32 %s99, 1
      %p103 = scmp.eq.s32.totalorder %s23, 1
      %p104 = scmp.ne.s32.totalorder %s99, %s101
      %p105 = scmp.eq.s32.totalorder %s23, 0
      %p106 = por %p104, %p105
      %p107 = scmp.ne.s32.totalorder %s99, %s101
      %p108 = scmp.eq.s32.totalorder %s28, 1
      %p109 = por %p107, %p108
      %p110 = scmp.ne.s32.totalorder %s101, %s102
      %p111 = scmp.eq.s32.totalorder %s28, 0
      %p112 = por %p110, %p111
      %p113 = scmp.ne.s32.totalorder %s101, %s102
      %p114 = scmp.eq.s32.totalorder %s29, 1
      %p115 = por %p113, %p114
      %p117 = scmp.ne.s32.totalorder %s102, %s116
      %p118 = scmp.eq.s32.totalorder %s29, 0
      %p119 = por %p117, %p118
      %s121 = sadd.s32 %s120, 1
      %p124 = scmp.eq.s32.totalorder %s23, 1
      %p125 = scmp.ne.s32.totalorder %s120, %s122
      %p126 = scmp.eq.s32.totalorder %s23, 0
      %p127 = por %p125, %p126
      %p128 = scmp.ne.s32.totalorder %s120, %s122
      %p129 = scmp.eq.s32.totalorder %s28, 1
      %p130 = por %p128, %p129
      %p131 = scmp.ne.s32.totalorder %s122, %s123
      %p132 = scmp.eq.s32.totalorder %s28, 0
      %p133 = por %p131, %p132
      %p134 = scmp.ne.s32.totalorder %s122, %s123
      %p135 = scmp.eq.s32.totalorder %s29, 1
      %p136 = por %p134, %p135
      %p138 = scmp.ne.s32.totalorder %s123, %s137
      %p139 = scmp.eq.s32.totalorder %s29, 0
      %p140 = por %p138, %p139
      %s142 = sadd.s32 %s141, 1
      %p145 = scmp.eq.s32.totalorder %s23, 1
      %p146 = scmp.ne.s32.totalorder %s141, %s143
      %p147 = scmp.eq.s32.totalorder %s23, 0
      %p148 = por %p146, %p147
      %p149 = scmp.ne.s32.totalorder %s141, %s143
      %p150 = scmp.eq.s32.totalorder %s28, 1
      %p151 = por %p149, %p150
      %p152 = scmp.ne.s32.totalorder %s143, %s144
      %p153 = scmp.eq.s32.totalorder %s28, 0
      %p154 = por %p152, %p153
      %p155 = scmp.ne.s32.totalorder %s143, %s144
      %p156 = scmp.eq.s32.totalorder %s29, 1
      %p157 = por %p155, %p156
      %p159 = scmp.ne.s32.totalorder %s144, %s158
      %p160 = scmp.eq.s32.totalorder %s29, 0
      %p161 = por %p159, %p160
      %s163 = sadd.s32 %s162, 1
      %p166 = scmp.eq.s32.totalorder %s23, 1
      %p167 = scmp.ne.s32.totalorder %s162, %s164
      %p168 = scmp.eq.s32.totalorder %s23, 0
      %p169 = por %p167, %p168
      %p170 = scmp.ne.s32.totalorder %s162, %s164
      %p171 = scmp.eq.s32.totalorder %s28, 1
      %p172 = por %p170, %p171
      %p173 = scmp.ne.s32.totalorder %s164, %s165
      %p174 = scmp.eq.s32.totalorder %s28, 0
      %p175 = por %p173, %p174
      %p176 = scmp.ne.s32.totalorder %s164, %s165
      %p177 = scmp.eq.s32.totalorder %s29, 1
      %p178 = por %p176, %p177
      %p180 = scmp.ne.s32.totalorder %s165, %s179
      %p181 = scmp.eq.s32.totalorder %s29, 0
      %p182 = por %p180, %p181
      %s184 = sadd.s32 %s183, 1
      %p187 = scmp.eq.s32.totalorder %s23, 1
      %p188 = scmp.ne.s32.totalorder %s183, %s185
      %p189 = scmp.eq.s32.totalorder %s23, 0
      %p190 = por %p188, %p189
      %p191 = scmp.ne.s32.totalorder %s183, %s185
      %p192 = scmp.eq.s32.totalorder %s28, 1
      %p193 = por %p191, %p192
      %p194 = scmp.ne.s32.totalorder %s185, %s186
      %p195 = scmp.eq.s32.totalorder %s28, 0
      %p196 = por %p194, %p195
      %p197 = scmp.ne.s32.totalorder %s185, %s186
      %p198 = scmp.eq.s32.totalorder %s29, 1
      %p199 = por %p197, %p198
      %p201 = scmp.ne.s32.totalorder %s186, %s200
      %p202 = scmp.eq.s32.totalorder %s29, 0
      %p203 = por %p201, %p202
      %s205 = sadd.s32 %s204, 1
      %p208 = scmp.eq.s32.totalorder %s23, 1
      %p209 = scmp.ne.s32.totalorder %s204, %s206
      %p210 = scmp.eq.s32.totalorder %s23, 0
      %p211 = por %p209, %p210
      %p212 = scmp.ne.s32.totalorder %s204, %s206
      %p213 = scmp.eq.s32.totalorder %s28, 1
      %p214 = por %p212, %p213
      %p215 = scmp.ne.s32.totalorder %s206, %s207
      %p216 = scmp.eq.s32.totalorder %s28, 0
      %p217 = por %p215, %p216
      %p218 = scmp.ne.s32.totalorder %s206, %s207
      %p219 = scmp.eq.s32.totalorder %s29, 1
      %p220 = por %p218, %p219
      %p222 = scmp.ne.s32.totalorder %s207, %s221
      %p223 = scmp.eq.s32.totalorder %s29, 0
      %p224 = por %p222, %p223
      %s225 = ssub.s32 %s23, %s30
      %p226 = scmp.eq.s32.totalorder %s225, 0
      %s228 = sadd.s32 %s227, 1
      %s229 = scalar_select %p226, %s227, %s228
      %p232 = pneg %p226
      %p233 = scmp.eq.s32.totalorder %s23, 1
      %p234 = por %p232, %p233
      %p235 = scmp.ne.s32.totalorder %s227, %s230
      %p236 = scmp.eq.s32.totalorder %s23, 0
      %p237 = por %p235, %p236
      %p238 = scmp.ne.s32.totalorder %s227, %s230
      %p239 = scmp.eq.s32.totalorder %s28, 1
      %p240 = por %p238, %p239
      %p241 = scmp.ne.s32.totalorder %s230, %s231
      %p242 = scmp.eq.s32.totalorder %s28, 0
      %p243 = por %p241, %p242
      %p244 = scmp.ne.s32.totalorder %s230, %s231
      %p245 = scmp.eq.s32.totalorder %s29, 1
      %p246 = por %p244, %p245
      %p248 = scmp.ne.s32.totalorder %s231, %s247
      %p249 = scmp.eq.s32.totalorder %s29, 0
      %p250 = por %p248, %p249
      %p251 = scmp.le.s32.totalorder 1, %s23
      %p252 = scmp.lt.s32.totalorder %s23, 3
      %p253 = pnand %p251, %p252
      %p254 = pneg %p253
      // Predicated region
      $region9: #{tpu_custom_call.1} parent=5 // pred_check
        _
      $region10: #{tpu_custom_call.1} parent=5 // pred_check_branch
        %256 = sbr.rel (%p253) target = $region12
      $region11: #{tpu_custom_call.1} parent=5 // pred_region
        %s257 = ssub.s32 %s23, 1
        // Predicated region
        $region13: #{tpu_custom_call.1} parent=11 // pred_check
          %p258 = pneg %p70
        $region14: #{tpu_custom_call.1} parent=11 // pred_check_branch
          %260 = sbr.rel (%p258) target = $region16
        $region15: #{tpu_custom_call.1} parent=11 // pred_region
          %s262 = ssub.s32 192, 192
          %263 = vsyncadd [#allocation6], %s262
          %s264 = sshll.u32 [#allocation5], 4
          %s265 = int_to_ptr.vmem [resolvable:$true] %s264
          %270 = dma.hbm_to_vmem [thread:$0]  %s1, 192, %s265, [#allocation6], 64, 64, 4
        $region16: #{tpu_custom_call.1} parent=11 // pred_fallthru
          _
        // Predicated region
        $region17: #{tpu_custom_call.1} parent=11 // pred_check
          %p271 = pneg %p91
        $region18: #{tpu_custom_call.1} parent=11 // pred_check_branch
          %273 = sbr.rel (%p271) target = $region20
        $region19: #{tpu_custom_call.1} parent=11 // pred_region
          _
        $region20: #{tpu_custom_call.1} parent=11 // pred_fallthru
          _
        // Predicated region
        $region21: #{tpu_custom_call.1} parent=11 // pred_check
          %p274 = pneg %p112
        $region22: #{tpu_custom_call.1} parent=11 // pred_check_branch
          %276 = sbr.rel (%p274) target = $region24
        $region23: #{tpu_custom_call.1} parent=11 // pred_region
          %s278 = ssub.s32 1024, 1024
          %279 = vsyncadd [#allocation6], %s278
          %s280 = sshll.u32 [#allocation7], 4
          %s281 = int_to_ptr.vmem [resolvable:$true] %s280
          %286 = dma.hbm_to_vmem [thread:$0]  %s3, 1024, %s281, [#allocation6], 64, 64, 4
        $region24: #{tpu_custom_call.1} parent=11 // pred_fallthru
          _
        // Predicated region
        $region25: #{tpu_custom_call.1} parent=11 // pred_check
          %p287 = pneg %p133
        $region26: #{tpu_custom_call.1} parent=11 // pred_check_branch
          %289 = sbr.rel (%p287) target = $region28
        $region27: #{tpu_custom_call.1} parent=11 // pred_region
          _
        $region28: #{tpu_custom_call.1} parent=11 // pred_fallthru
          _
        // Predicated region
        $region29: #{tpu_custom_call.1} parent=11 // pred_check
          %p290 = pneg %p154
        $region30: #{tpu_custom_call.1} parent=11 // pred_check_branch
          %292 = sbr.rel (%p290) target = $region32
        $region31: #{tpu_custom_call.1} parent=11 // pred_region
          %s294 = ssub.s32 2048, 2048
          %295 = vsyncadd [#allocation9], %s294
          %s296 = sshll.u32 [#allocation8], 4
          %s297 = int_to_ptr.vmem [resolvable:$true] %s296
          %302 = dma.hbm_to_vmem [thread:$0]  %s5, 2048, %s297, [#allocation9], 128, 128, 8
        $region32: #{tpu_custom_call.1} parent=11 // pred_fallthru
          _
        // Predicated region
        $region33: #{tpu_custom_call.1} parent=11 // pred_check
          %p303 = pneg %p175
        $region34: #{tpu_custom_call.1} parent=11 // pred_check_branch
          %305 = sbr.rel (%p303) target = $region36
        $region35: #{tpu_custom_call.1} parent=11 // pred_region
          _
        $region36: #{tpu_custom_call.1} parent=11 // pred_fallthru
          _
        // Predicated region
        $region37: #{tpu_custom_call.1} parent=11 // pred_check
          %p306 = pneg %p196
        $region38: #{tpu_custom_call.1} parent=11 // pred_check_branch
          %308 = sbr.rel (%p306) target = $region40
        $region39: #{tpu_custom_call.1} parent=11 // pred_region
          %s310 = ssub.s32 1024, 1024
          %311 = vsyncadd [#allocation9], %s310
          %s312 = sshll.u32 [#allocation10], 4
          %s313 = int_to_ptr.vmem [resolvable:$true] %s312
          %318 = dma.hbm_to_vmem [thread:$0]  %s7, 1024, %s313, [#allocation9], 64, 64, 4
        $region40: #{tpu_custom_call.1} parent=11 // pred_fallthru
          _
        // Predicated region
        $region41: #{tpu_custom_call.1} parent=11 // pred_check
          %p319 = pneg %p217
        $region42: #{tpu_custom_call.1} parent=11 // pred_check_branch
          %321 = sbr.rel (%p319) target = $region44
        $region43: #{tpu_custom_call.1} parent=11 // pred_region
          _
        $region44: #{tpu_custom_call.1} parent=11 // pred_fallthru
          _
      $region12: #{tpu_custom_call.1} parent=5 // pred_fallthru
        _
      %p322 = scmp.lt.s32.totalorder %s23, 2
      // Predicated region
      $region45: #{tpu_custom_call.1} parent=5 // pred_check
        %p323 = pneg %p322
      $region46: #{tpu_custom_call.1} parent=5 // pred_check_branch
        %325 = sbr.rel (%p323) target = $region48
      $region47: #{tpu_custom_call.1} parent=5 // pred_region
        // Predicated region
        $region49: #{tpu_custom_call.1} parent=47 // pred_check
          %p326 = pneg %p43
        $region50: #{tpu_custom_call.1} parent=47 // pred_check_branch
          %328 = sbr.rel (%p326) target = $region52
        $region51: #{tpu_custom_call.1} parent=47 // pred_region
          %s329 = sand.u32 %s33, 1
          %s330 = scalar_lea.sflag [#allocation3], %s329
          %s331 = sand.u32 %s33, 1
          %s332 = smul.addr %s331, 4
          %s333 = scalar_lea.vmem [#allocation2], %s332
          %s335 = ssub.s32 64, 64
          %336 = vsyncadd %s330, %s335
          %s337 = smul.addr %s23, 64
          %s338 = scalar_lea.hbm %s0, %s337
          %s340 = sshll.u32 %s333, 4
          %s341 = int_to_ptr.vmem [resolvable:$true] %s340
          %343 = dma.hbm_to_vmem [thread:$0]  %s338, 64, %s341, %s330
        $region52: #{tpu_custom_call.1} parent=47 // pred_fallthru
          _
      $region48: #{tpu_custom_call.1} parent=5 // pred_fallthru
        _
      %p344 = scmp.le.s32.totalorder 1, %s23
      %p345 = scmp.lt.s32.totalorder %s23, 3
      %p346 = pnand %p344, %p345
      %p347 = pneg %p346
      // Predicated region
      $region53: #{tpu_custom_call.1} parent=5 // pred_check
        _
      $region54: #{tpu_custom_call.1} parent=5 // pred_check_branch
        %349 = sbr.rel (%p346) target = $region56
      $region55: #{tpu_custom_call.1} parent=5 // pred_region
        %s350 = ssub.s32 %s23, 1
        %s351 = sand.u32 %s36, 1
        %s352 = scalar_lea.sflag [#allocation3], %s351
        %s353 = sand.u32 %s36, 1
        %s354 = smul.addr %s353, 4
        %s355 = scalar_lea.vmem [#allocation2], %s354
        // Predicated region
        $region57: #{tpu_custom_call.1} parent=55 // pred_check
          %p356 = pneg %p49
        $region58: #{tpu_custom_call.1} parent=55 // pred_check_branch
          %358 = sbr.rel (%p356) target = $region60
        $region59: #{tpu_custom_call.1} parent=55 // pred_region
          %359 = dma.done %s352, 64
        $region60: #{tpu_custom_call.1} parent=55 // pred_fallthru
          _
        // Predicated region
        $region61: #{tpu_custom_call.1} parent=55 // pred_check
          %p360 = pneg %p70
        $region62: #{tpu_custom_call.1} parent=55 // pred_check_branch
          %362 = sbr.rel (%p360) target = $region64
        $region63: #{tpu_custom_call.1} parent=55 // pred_region
          %363 = dma.done [#allocation6], 192
        $region64: #{tpu_custom_call.1} parent=55 // pred_fallthru
          _
        // Predicated region
        $region65: #{tpu_custom_call.1} parent=55 // pred_check
          %p364 = pneg %p112
        $region66: #{tpu_custom_call.1} parent=55 // pred_check_branch
          %366 = sbr.rel (%p364) target = $region68
        $region67: #{tpu_custom_call.1} parent=55 // pred_region
          %367 = dma.done [#allocation6], 1024
        $region68: #{tpu_custom_call.1} parent=55 // pred_fallthru
          _
        // Predicated region
        $region69: #{tpu_custom_call.1} parent=55 // pred_check
          %p368 = pneg %p154
        $region70: #{tpu_custom_call.1} parent=55 // pred_check_branch
          %370 = sbr.rel (%p368) target = $region72
        $region71: #{tpu_custom_call.1} parent=55 // pred_region
          %371 = dma.done [#allocation9], 2048
        $region72: #{tpu_custom_call.1} parent=55 // pred_fallthru
          _
        // Predicated region
        $region73: #{tpu_custom_call.1} parent=55 // pred_check
          %p372 = pneg %p196
        $region74: #{tpu_custom_call.1} parent=55 // pred_check_branch
          %374 = sbr.rel (%p372) target = $region76
        $region75: #{tpu_custom_call.1} parent=55 // pred_region
          %375 = dma.done [#allocation9], 1024
        $region76: #{tpu_custom_call.1} parent=55 // pred_fallthru
          _
        %s376 = sand.u32 %s36, 1
        %s377 = scalar_lea.sflag [#allocation3], %s376
        %s378 = sand.u32 %s36, 1
        %s379 = smul.addr %s378, 4
        %s380 = scalar_lea.vmem [#allocation2], %s379
        %p381 = pneg %p49
        %p382 = pneg %p46
        %p383 = pneg %p70
        %p384 = pneg %p67
        %p385 = pneg %p91
        %p386 = pneg %p88
        %p387 = pneg %p112
        %p388 = pneg %p109
        %p389 = pneg %p133
        %p390 = pneg %p130
        %p391 = pneg %p154
        %p392 = pneg %p151
        %p393 = pneg %p175
        %p394 = pneg %p172
        %p395 = pneg %p196
        %p396 = pneg %p193
        %p397 = pneg %p217
        %p398 = pneg %p214
        %p399 = pneg %p243
        %p400 = pneg %p240
        %s401 = sand.u32 %s230, 1
        %s402 = scalar_lea.sflag [#allocation4], %s401
        %s403 = sand.u32 %s230, 1
        %s404 = smul.addr %s403, 4
        %s405 = scalar_lea.vmem [#allocation11], %s404
        %v407 = vld [vmem:[%s355] sm:$0xf]
        %v408 = vld [vmem:[#allocation5] sm:$0xf]
        %v409 = vld [vmem:[#allocation5 + $0x4] sm:$0xf]
        %v410 = vld [vmem:[#allocation5 + $0x8] sm:$0xf]
        %v411 = vld [vmem:[%s2] sm:$0x1]
        %v413 = vlaneseq
        %v414 = vshrl.u32 %v413, 7
        %v415 = vsub.s32 0, %v414
        %v416 = vrot.slane %v411, %v415
        %v421 = vunpack.c.l.b16 %v408
        %v422 = vunpack.c.l.b16 %v409
        %v423 = vunpack.c.l.b16 %v410
        %v424 = vpack.c.b16 %v422, %v421
        %v425 = vpack.c.b16 %v423, %v423
        %vm427 = vcmask 195584
        %v429 = vsel %vm427, %v407, 0
        %vm431 = vcmask 1043456
        %v433 = vsel %vm431, %v425, 0
        %435 = vmatprep.subr.bf16.mxu0 0
        %436 = vmatpush1.bf16.msra.mxu0 0
        %437 = vmatprep.subr.bf16.mxu0 0
        %438 = vmatpush1.bf16.msra.mxu0 0
        %439 = vmatprep.subr.bf16.mxu0 0
        %440 = vmatpush1.bf16.msra.mxu0 0
        %441 = vmatprep.subr.bf16.mxu0 0
        %442 = vmatpush1.bf16.msra.mxu0 0
        %443 = vmatprep.subr.bf16.mxu0 0
        %444 = vmatpush1.bf16.msra.mxu0 0
        %445 = vmatprep.subr.bf16.mxu0 0
        %446 = vmatpush1.bf16.msra.mxu0 0
        %447 = vmatprep.subr.bf16.mxu0 0
        %448 = vmatpush1.bf16.msra.mxu0 %v433
        %449 = vmatprep.subr.bf16.mxu0 0
        %450 = vmatpush1.bf16.msra.mxu0 %v424
        %451 = vmatprep.subr.bf16.mxu0 0
        %452 = vmatpush2.bf16.msra.mxu0 0
        %453 = vmatprep.subr.bf16.mxu0 0
        %454 = vmatpush2.bf16.msra.mxu0 0
        %455 = vmatprep.subr.bf16.mxu0 0
        %456 = vmatpush2.bf16.msra.mxu0 0
        %457 = vmatprep.subr.bf16.mxu0 0
        %458 = vmatpush2.bf16.msra.mxu0 0
        %459 = vmatprep.subr.bf16.mxu0 0
        %460 = vmatpush2.bf16.msra.mxu0 0
        %461 = vmatprep.subr.bf16.mxu0 0
        %462 = vmatpush2.bf16.msra.mxu0 0
        %463 = vmatprep.subr.bf16.mxu0 0
        %464 = vmatpush2.bf16.msra.mxu0 0
        %465 = vmatprep.subr.bf16.mxu0 0
        %466 = vmatpush2.bf16.msra.mxu0 0
        %467 = vmatprep.mubr.bf16.mxu0 0
        %468 = vmatmul.mubr.bf16.gmra.mxu0 %v429
        %v469 = vpop.f32.mrf.mxu0
        %v470 = vadd.f32 %v416, %v469
        %v471 = vpop.f32.mrf.mxu0
        %v472 = vpop.f32.mrf.mxu0
        %v473 = vpop.f32.mrf.mxu0
        %474 = vdwg.mxu0
        %v475 = vmax.f32 %v470, 0.0
        %v476 = vpack.c.bf16 %v475, %v475
        %v477 = vld [vmem:[#allocation7] sm:$0xf]
        %v478 = vld [vmem:[#allocation7 + $0x4] sm:$0xf]
        %v479 = vld [vmem:[#allocation7 + $0x8] sm:$0xf]
        %v480 = vld [vmem:[#allocation7 + $0xc] sm:$0xf]
        %v481 = vld [vmem:[#allocation7 + $0x10] sm:$0xf]
        %v482 = vld [vmem:[#allocation7 + $0x14] sm:$0xf]
        %v483 = vld [vmem:[#allocation7 + $0x18] sm:$0xf]
        %v484 = vld [vmem:[#allocation7 + $0x1c] sm:$0xf]
        %v485 = vld [vmem:[#allocation7 + $0x20] sm:$0xf]
        %v486 = vld [vmem:[#allocation7 + $0x24] sm:$0xf]
        %v487 = vld [vmem:[#allocation7 + $0x28] sm:$0xf]
        %v488 = vld [vmem:[#allocation7 + $0x2c] sm:$0xf]
        %v489 = vld [vmem:[#allocation7 + $0x30] sm:$0xf]
        %v490 = vld [vmem:[#allocation7 + $0x34] sm:$0xf]
        %v491 = vld [vmem:[#allocation7 + $0x38] sm:$0xf]
        %v492 = vld [vmem:[#allocation7 + $0x3c] sm:$0xf]
        %v493 = vld [vmem:[%s4] sm:$0x1]
        %v495 = vlaneseq
        %v496 = vshrl.u32 %v495, 7
        %v497 = vsub.s32 0, %v496
        %v498 = vrot.slane %v493, %v497
        %v516 = vunpack.c.l.b16 %v477
        %v517 = vunpack.c.l.b16 %v478
        %v518 = vunpack.c.l.b16 %v479
        %v519 = vunpack.c.l.b16 %v480
        %v520 = vunpack.c.l.b16 %v481
        %v521 = vunpack.c.l.b16 %v482
        %v522 = vunpack.c.l.b16 %v483
        %v523 = vunpack.c.l.b16 %v484
        %v524 = vunpack.c.l.b16 %v485
        %v525 = vunpack.c.l.b16 %v486
        %v526 = vunpack.c.l.b16 %v487
        %v527 = vunpack.c.l.b16 %v488
        %v528 = vunpack.c.l.b16 %v489
        %v529 = vunpack.c.l.b16 %v490
        %v530 = vunpack.c.l.b16 %v491
        %v531 = vunpack.c.l.b16 %v492
        %v532 = vpack.c.b16 %v517, %v516
        %v533 = vpack.c.b16 %v519, %v518
        %v534 = vpack.c.b16 %v521, %v520
        %v535 = vpack.c.b16 %v523, %v522
        %v536 = vpack.c.b16 %v525, %v524
        %v537 = vpack.c.b16 %v527, %v526
        %v538 = vpack.c.b16 %v529, %v528
        %v539 = vpack.c.b16 %v531, %v530
        %548 = vmatprep.subr.bf16.mxu0 0
        %549 = vmatpush1.bf16.msra.mxu0 %v539
        %550 = vmatprep.subr.bf16.mxu0 0
        %551 = vmatpush1.bf16.msra.mxu0 %v538
        %552 = vmatprep.subr.bf16.mxu0 0
        %553 = vmatpush1.bf16.msra.mxu0 %v537
        %554 = vmatprep.subr.bf16.mxu0 0
        %555 = vmatpush1.bf16.msra.mxu0 %v536
        %556 = vmatprep.subr.bf16.mxu0 0
        %557 = vmatpush1.bf16.msra.mxu0 %v535
        %558 = vmatprep.subr.bf16.mxu0 0
        %559 = vmatpush1.bf16.msra.mxu0 %v534
        %560 = vmatprep.subr.bf16.mxu0 0
        %561 = vmatpush1.bf16.msra.mxu0 %v533
        %562 = vmatprep.subr.bf16.mxu0 0
        %563 = vmatpush1.bf16.msra.mxu0 %v532
        %564 = vmatprep.subr.bf16.mxu0 0
        %565 = vmatpush2.bf16.msra.mxu0 0
        %566 = vmatprep.subr.bf16.mxu0 0
        %567 = vmatpush2.bf16.msra.mxu0 0
        %568 = vmatprep.subr.bf16.mxu0 0
        %569 = vmatpush2.bf16.msra.mxu0 0
        %570 = vmatprep.subr.bf16.mxu0 0
        %571 = vmatpush2.bf16.msra.mxu0 0
        %572 = vmatprep.subr.bf16.mxu0 0
        %573 = vmatpush2.bf16.msra.mxu0 0
        %574 = vmatprep.subr.bf16.mxu0 0
        %575 = vmatpush2.bf16.msra.mxu0 0
        %576 = vmatprep.subr.bf16.mxu0 0
        %577 = vmatpush2.bf16.msra.mxu0 0
        %578 = vmatprep.subr.bf16.mxu0 0
        %579 = vmatpush2.bf16.msra.mxu0 0
        %580 = vmatprep.mubr.bf16.mxu0 0
        %581 = vmatmul.mubr.bf16.gmra.mxu0 %v476
        %v582 = vpop.f32.mrf.mxu0
        %v583 = vadd.f32 %v498, %v582
        %v584 = vpop.f32.mrf.mxu0
        %v585 = vpop.f32.mrf.mxu0
        %v586 = vpop.f32.mrf.mxu0
        %587 = vdwg.mxu0
        %v588 = vmax.f32 %v583, 0.0
        %v589 = vpack.c.bf16 %v588, %v588
        %v590 = vld [vmem:[#allocation8] sm:$0xff]
        %v591 = vld [vmem:[#allocation8 + $0x8] sm:$0xff]
        %v592 = vld [vmem:[#allocation8 + $0x10] sm:$0xff]
        %v593 = vld [vmem:[#allocation8 + $0x18] sm:$0xff]
        %v594 = vld [vmem:[#allocation8 + $0x20] sm:$0xff]
        %v595 = vld [vmem:[#allocation8 + $0x28] sm:$0xff]
        %v596 = vld [vmem:[#allocation8 + $0x30] sm:$0xff]
        %v597 = vld [vmem:[#allocation8 + $0x38] sm:$0xff]
        %v598 = vld [vmem:[#allocation8 + $0x40] sm:$0xff]
        %v599 = vld [vmem:[#allocation8 + $0x48] sm:$0xff]
        %v600 = vld [vmem:[#allocation8 + $0x50] sm:$0xff]
        %v601 = vld [vmem:[#allocation8 + $0x58] sm:$0xff]
        %v602 = vld [vmem:[#allocation8 + $0x60] sm:$0xff]
        %v603 = vld [vmem:[#allocation8 + $0x68] sm:$0xff]
        %v604 = vld [vmem:[#allocation8 + $0x70] sm:$0xff]
        %v605 = vld [vmem:[#allocation8 + $0x78] sm:$0xff]
        %v606 = vld [vmem:[%s6] sm:$0x3]
        %v608 = vlaneseq
        %v609 = vshrl.u32 %v608, 7
        %v610 = vsub.s32 0, %v609
        %v611 = vrot.slane %v606, %v610
        %v612 = vlaneseq
        %v613 = vshrl.u32 %v612, 7
        %v614 = vsub.s32 1, %v613
        %v615 = vrot.slane %v606, %v614
        %v634 = vunpack.c.l.b16 %v590
        %v635 = vunpack.c.h.b16 %v590
        %v636 = vunpack.c.l.b16 %v591
        %v637 = vunpack.c.h.b16 %v591
        %v638 = vunpack.c.l.b16 %v592
        %v639 = vunpack.c.h.b16 %v592
        %v640 = vunpack.c.l.b16 %v593
        %v641 = vunpack.c.h.b16 %v593
        %v642 = vunpack.c.l.b16 %v594
        %v643 = vunpack.c.h.b16 %v594
        %v644 = vunpack.c.l.b16 %v595
        %v645 = vunpack.c.h.b16 %v595
        %v646 = vunpack.c.l.b16 %v596
        %v647 = vunpack.c.h.b16 %v596
        %v648 = vunpack.c.l.b16 %v597
        %v649 = vunpack.c.h.b16 %v597
        %v650 = vunpack.c.l.b16 %v598
        %v651 = vunpack.c.h.b16 %v598
        %v652 = vunpack.c.l.b16 %v599
        %v653 = vunpack.c.h.b16 %v599
        %v654 = vunpack.c.l.b16 %v600
        %v655 = vunpack.c.h.b16 %v600
        %v656 = vunpack.c.l.b16 %v601
        %v657 = vunpack.c.h.b16 %v601
        %v658 = vunpack.c.l.b16 %v602
        %v659 = vunpack.c.h.b16 %v602
        %v660 = vunpack.c.l.b16 %v603
        %v661 = vunpack.c.h.b16 %v603
        %v662 = vunpack.c.l.b16 %v604
        %v663 = vunpack.c.h.b16 %v604
        %v664 = vunpack.c.l.b16 %v605
        %v665 = vunpack.c.h.b16 %v605
        %v666 = vpack.c.b16 %v636, %v634
        %v667 = vpack.c.b16 %v637, %v635
        %v668 = vpack.c.b16 %v640, %v638
        %v669 = vpack.c.b16 %v641, %v639
        %v670 = vpack.c.b16 %v644, %v642
        %v671 = vpack.c.b16 %v645, %v643
        %v672 = vpack.c.b16 %v648, %v646
        %v673 = vpack.c.b16 %v649, %v647
        %v674 = vpack.c.b16 %v652, %v650
        %v675 = vpack.c.b16 %v653, %v651
        %v676 = vpack.c.b16 %v656, %v654
        %v677 = vpack.c.b16 %v657, %v655
        %v678 = vpack.c.b16 %v660, %v658
        %v679 = vpack.c.b16 %v661, %v659
        %v680 = vpack.c.b16 %v664, %v662
        %v681 = vpack.c.b16 %v665, %v663
        %698 = vmatprep.subr.bf16.mxu0 %v681
        %699 = vmatpush1.bf16.msra.mxu0 %v680
        %700 = vmatprep.subr.bf16.mxu0 %v679
        %701 = vmatpush1.bf16.msra.mxu0 %v678
        %702 = vmatprep.subr.bf16.mxu0 %v677
        %703 = vmatpush1.bf16.msra.mxu0 %v676
        %704 = vmatprep.subr.bf16.mxu0 %v675
        %705 = vmatpush1.bf16.msra.mxu0 %v674
        %706 = vmatprep.subr.bf16.mxu0 %v673
        %707 = vmatpush1.bf16.msra.mxu0 %v672
        %708 = vmatprep.subr.bf16.mxu0 %v671
        %709 = vmatpush1.bf16.msra.mxu0 %v670
        %710 = vmatprep.subr.bf16.mxu0 %v669
        %711 = vmatpush1.bf16.msra.mxu0 %v668
        %712 = vmatprep.subr.bf16.mxu0 %v667
        %713 = vmatpush1.bf16.msra.mxu0 %v666
        %714 = vmatprep.subr.bf16.mxu0 0
        %715 = vmatpush2.bf16.msra.mxu0 0
        %716 = vmatprep.subr.bf16.mxu0 0
        %717 = vmatpush2.bf16.msra.mxu0 0
        %718 = vmatprep.subr.bf16.mxu0 0
        %719 = vmatpush2.bf16.msra.mxu0 0
        %720 = vmatprep.subr.bf16.mxu0 0
        %721 = vmatpush2.bf16.msra.mxu0 0
        %722 = vmatprep.subr.bf16.mxu0 0
        %723 = vmatpush2.bf16.msra.mxu0 0
        %724 = vmatprep.subr.bf16.mxu0 0
        %725 = vmatpush2.bf16.msra.mxu0 0
        %726 = vmatprep.subr.bf16.mxu0 0
        %727 = vmatpush2.bf16.msra.mxu0 0
        %728 = vmatprep.subr.bf16.mxu0 0
        %729 = vmatpush2.bf16.msra.mxu0 0
        %730 = vmatprep.mubr.bf16.mxu0 0
        %731 = vmatmul.mubr.bf16.gmra.mxu0 %v589
        %v732 = vpop.f32.mrf.mxu0
        %v733 = vadd.f32 %v611, %v732
        %v734 = vpop.f32.mrf.mxu0
        %v735 = vadd.f32 %v615, %v734
        %v736 = vpop.f32.mrf.mxu0
        %v737 = vpop.f32.mrf.mxu0
        %738 = vdwg.mxu0
        %v739 = vmax.f32 %v733, 0.0
        %v740 = vmul.f32 %v739, %v735
        %v741 = vpack.c.bf16 %v740, %v740
        %v742 = vld [vmem:[#allocation10] sm:$0xf]
        %v743 = vld [vmem:[#allocation10 + $0x4] sm:$0xf]
        %v744 = vld [vmem:[#allocation10 + $0x8] sm:$0xf]
        %v745 = vld [vmem:[#allocation10 + $0xc] sm:$0xf]
        %v746 = vld [vmem:[#allocation10 + $0x10] sm:$0xf]
        %v747 = vld [vmem:[#allocation10 + $0x14] sm:$0xf]
        %v748 = vld [vmem:[#allocation10 + $0x18] sm:$0xf]
        %v749 = vld [vmem:[#allocation10 + $0x1c] sm:$0xf]
        %v750 = vld [vmem:[#allocation10 + $0x20] sm:$0xf]
        %v751 = vld [vmem:[#allocation10 + $0x24] sm:$0xf]
        %v752 = vld [vmem:[#allocation10 + $0x28] sm:$0xf]
        %v753 = vld [vmem:[#allocation10 + $0x2c] sm:$0xf]
        %v754 = vld [vmem:[#allocation10 + $0x30] sm:$0xf]
        %v755 = vld [vmem:[#allocation10 + $0x34] sm:$0xf]
        %v756 = vld [vmem:[#allocation10 + $0x38] sm:$0xf]
        %v757 = vld [vmem:[#allocation10 + $0x3c] sm:$0xf]
        %v758 = vld [vmem:[%s8] sm:$0x1]
        %v760 = vlaneseq
        %v761 = vshrl.u32 %v760, 7
        %v762 = vsub.s32 0, %v761
        %v763 = vrot.slane %v758, %v762
        %v781 = vunpack.c.l.b16 %v742
        %v782 = vunpack.c.l.b16 %v743
        %v783 = vunpack.c.l.b16 %v744
        %v784 = vunpack.c.l.b16 %v745
        %v785 = vunpack.c.l.b16 %v746
        %v786 = vunpack.c.l.b16 %v747
        %v787 = vunpack.c.l.b16 %v748
        %v788 = vunpack.c.l.b16 %v749
        %v789 = vunpack.c.l.b16 %v750
        %v790 = vunpack.c.l.b16 %v751
        %v791 = vunpack.c.l.b16 %v752
        %v792 = vunpack.c.l.b16 %v753
        %v793 = vunpack.c.l.b16 %v754
        %v794 = vunpack.c.l.b16 %v755
        %v795 = vunpack.c.l.b16 %v756
        %v796 = vunpack.c.l.b16 %v757
        %v797 = vpack.c.b16 %v782, %v781
        %v798 = vpack.c.b16 %v784, %v783
        %v799 = vpack.c.b16 %v786, %v785
        %v800 = vpack.c.b16 %v788, %v787
        %v801 = vpack.c.b16 %v790, %v789
        %v802 = vpack.c.b16 %v792, %v791
        %v803 = vpack.c.b16 %v794, %v793
        %v804 = vpack.c.b16 %v796, %v795
        %813 = vmatprep.subr.bf16.mxu0 0
        %814 = vmatpush1.bf16.msra.mxu0 %v804
        %815 = vmatprep.subr.bf16.mxu0 0
        %816 = vmatpush1.bf16.msra.mxu0 %v803
        %817 = vmatprep.subr.bf16.mxu0 0
        %818 = vmatpush1.bf16.msra.mxu0 %v802
        %819 = vmatprep.subr.bf16.mxu0 0
        %820 = vmatpush1.bf16.msra.mxu0 %v801
        %821 = vmatprep.subr.bf16.mxu0 0
        %822 = vmatpush1.bf16.msra.mxu0 %v800
        %823 = vmatprep.subr.bf16.mxu0 0
        %824 = vmatpush1.bf16.msra.mxu0 %v799
        %825 = vmatprep.subr.bf16.mxu0 0
        %826 = vmatpush1.bf16.msra.mxu0 %v798
        %827 = vmatprep.subr.bf16.mxu0 0
        %828 = vmatpush1.bf16.msra.mxu0 %v797
        %829 = vmatprep.subr.bf16.mxu0 0
        %830 = vmatpush2.bf16.msra.mxu0 0
        %831 = vmatprep.subr.bf16.mxu0 0
        %832 = vmatpush2.bf16.msra.mxu0 0
        %833 = vmatprep.subr.bf16.mxu0 0
        %834 = vmatpush2.bf16.msra.mxu0 0
        %835 = vmatprep.subr.bf16.mxu0 0
        %836 = vmatpush2.bf16.msra.mxu0 0
        %837 = vmatprep.subr.bf16.mxu0 0
        %838 = vmatpush2.bf16.msra.mxu0 0
        %839 = vmatprep.subr.bf16.mxu0 0
        %840 = vmatpush2.bf16.msra.mxu0 0
        %841 = vmatprep.subr.bf16.mxu0 0
        %842 = vmatpush2.bf16.msra.mxu0 0
        %843 = vmatprep.subr.bf16.mxu0 0
        %844 = vmatpush2.bf16.msra.mxu0 0
        %845 = vmatprep.mubr.bf16.mxu0 0
        %846 = vmatmul.mubr.bf16.gmra.mxu0 %v741
        %v847 = vpop.f32.mrf.mxu0
        %v848 = vadd.f32 %v763, %v847
        %v849 = vpop.f32.mrf.mxu0
        %v850 = vpop.f32.mrf.mxu0
        %v851 = vpop.f32.mrf.mxu0
        %852 = vdwg.mxu0
        %v853 = vpack.c.bf16 %v848, %v848
        %854 = vst [vmem:[%s405] sm:$0xf] %v853
        %s855 = sand.u32 %s230, 1
        %s856 = scalar_lea.sflag [#allocation4], %s855
        %s857 = sand.u32 %s230, 1
        %s858 = smul.addr %s857, 4
        %s859 = scalar_lea.vmem [#allocation11], %s858
        // Predicated region
        $region77: #{tpu_custom_call.1} parent=55 // pred_check
          %p860 = pneg %p240
        $region78: #{tpu_custom_call.1} parent=55 // pred_check_branch
          %862 = sbr.rel (%p860) target = $region80
        $region79: #{tpu_custom_call.1} parent=55 // pred_region
          %s864 = ssub.s32 64, 64
          %865 = vsyncadd %s856, %s864
          %s866 = smul.addr %s28, 64
          %s867 = scalar_lea.hbm %s9, %s866
          %s869 = sshll.u32 %s859, 4
          %s870 = int_to_ptr.vmem [resolvable:$true] %s869
          %872 = dma.vmem_to_hbm [thread:$0]  %s870, 64, %s867, %s856
        $region80: #{tpu_custom_call.1} parent=55 // pred_fallthru
          _
      $region56: #{tpu_custom_call.1} parent=5 // pred_fallthru
        _
      %p873 = scmp.le.s32.totalorder 2, %s23
      // Predicated region
      $region81: #{tpu_custom_call.1} parent=5 // pred_check
        %p874 = pneg %p873
      $region82: #{tpu_custom_call.1} parent=5 // pred_check_branch
        %876 = sbr.rel (%p874) target = $region84
      $region83: #{tpu_custom_call.1} parent=5 // pred_region
        %s877 = ssub.s32 %s23, 2
        // Predicated region
        $region85: #{tpu_custom_call.1} parent=83 // pred_check
          %p878 = pneg %p246
        $region86: #{tpu_custom_call.1} parent=83 // pred_check_branch
          %880 = sbr.rel (%p878) target = $region88
        $region87: #{tpu_custom_call.1} parent=83 // pred_region
          %s881 = sand.u32 %s231, 1
          %s882 = scalar_lea.sflag [#allocation4], %s881
          %s883 = sand.u32 %s231, 1
          %s884 = smul.addr %s883, 4
          %s885 = scalar_lea.vmem [#allocation11], %s884
          %886 = dma.done %s882, 64
        $region88: #{tpu_custom_call.1} parent=83 // pred_fallthru
          _
      $region84: #{tpu_custom_call.1} parent=5 // pred_fallthru
        _
    $region6: #{tpu_custom_call.1} parent=1 // loop_footer
      %s27 = sadd.s32 1, %s23
    $region7: #{tpu_custom_call.1} parent=1 // loop_footer_branch
      %22 = sbr.rel target = $region3
    $region8: #{tpu_custom_call.1} parent=1 // loop_exit
      _
    %887 = vsyncpa [#allocation3], 1
    %s888 = scalar_lea.sflag [#allocation3], 1
    %889 = vsyncpa %s888, 1
    %890 = vsyncpa [#allocation6], 1
    %891 = vsyncpa [#allocation9], 1
    %892 = vsyncpa [#allocation4], 1
    %s893 = scalar_lea.sflag [#allocation4], 1
    %894 = vsyncpa %s893, 1

</llo_original>
